<compile_context>
chip_gen: v5e
topology: v5e:2x2
jax: 0.10.0
libtpu: 0.0.40
codegen_flags: <defaults>
</compile_context>

<pallas_src>
import jax
import jax.numpy as jnp
from jax.experimental import pallas as pl
from jax.experimental.pallas import tpu as pltpu


def mlp_kernel(x_ref, w1_ref, b1_ref, w2_ref, b2_ref,
               w3_ref, b3_ref, w4_ref, b4_ref, o_ref):
    # Layer 1: (TB, Dp) bf16 @ (Dp, Hp) bf16 -> f32 acc, bias/ReLU in f32.
    h = jnp.dot(x_ref[...], w1_ref[...], preferred_element_type=jnp.float32) + b1_ref[...]
    h = jnp.maximum(h, 0.0).astype(jnp.bfloat16)
    # Layer 2: (TB, Hp) @ (Hp, 256)
    h = jnp.dot(h, w2_ref[...], preferred_element_type=jnp.float32) + b2_ref[...]
    h = jnp.maximum(h, 0.0).astype(jnp.bfloat16)
    # Layer 3: (TB, 256) @ (256, 128)
    h = jnp.dot(h, w3_ref[...], preferred_element_type=jnp.float32) + b3_ref[...]
    h = jnp.maximum(h, 0.0).astype(jnp.bfloat16)
    # Dropout: identity (eval mode).
    # Layer 4: (TB, 128) @ (128, Cp) -> lane-dense f32 store.
    out = jnp.dot(h, w4_ref[...], preferred_element_type=jnp.float32) + b4_ref[...]
    o_ref[...] = out.astype(o_ref.dtype)


def _round_up(n, m):
    return ((n + m - 1) // m) * m


def _pad_to(arr, shape):
    pads = [(0, t - s) for s, t in zip(arr.shape, shape)]
    if all(p == (0, 0) for p in pads):
        return arr
    return jnp.pad(arr, pads)


def _choose_tile_b(B):
    # Big tiles amortize per-grid-step overhead (~0.35 us) and fill the MXU M dim
    # (256 on v6e/v7x, 128 on v5e).  Keep >=2 grid steps when the batch allows so
    # v7x's two TensorCores both get work.
    if B >= 1024:
        return 512
    if B >= 512:
        return 256
    if B >= 256:
        return 128
    return _round_up(max(B, 1), 8)


def mlp_forward(x, params, *, tile_b=None):
    """x: (B, D) float32; params: dict of (in, out) weights and (1, out) biases (float32)."""
    B, D = x.shape
    w1, b1 = params["w1"], params["b1"]
    w2, b2 = params["w2"], params["b2"]
    w3, b3 = params["w3"], params["b3"]
    w4, b4 = params["w4"], params["b4"]
    H = w1.shape[1]
    M2 = w2.shape[1]          # 256
    M3 = w3.shape[1]          # 64
    C = w4.shape[1]

    if tile_b is None:
        tile_b = _choose_tile_b(B)

    # Lane-pad every feature dim to a multiple of 128; pad batch to a tile multiple.
    Dp = _round_up(D, 128)
    Hp = _round_up(H, 128)
    M2p = _round_up(M2, 128)
    M3p = _round_up(M3, 128)
    Cp = _round_up(C, 128)
    Bp = _round_up(B, tile_b)

    # bf16 activations/weights (halved HBM traffic, MXU bf16 rate); f32 biases.
    xp = _pad_to(x, (Bp, Dp)).astype(jnp.bfloat16)
    w1p = _pad_to(w1, (Dp, Hp)).astype(jnp.bfloat16)
    w2p = _pad_to(w2, (Hp, M2p)).astype(jnp.bfloat16)
    w3p = _pad_to(w3, (M2p, M3p)).astype(jnp.bfloat16)
    w4p = _pad_to(w4, (M3p, Cp)).astype(jnp.bfloat16)
    b1p = _pad_to(b1, (1, Hp)).astype(jnp.float32)
    b2p = _pad_to(b2, (1, M2p)).astype(jnp.float32)
    b3p = _pad_to(b3, (1, M3p)).astype(jnp.float32)
    b4p = _pad_to(b4, (1, Cp)).astype(jnp.float32)

    def full(shape):
        nd = len(shape)
        return pl.BlockSpec(shape, lambda i, _nd=nd: (0,) * _nd)

    grid_spec = pltpu.PrefetchScalarGridSpec(
        num_scalar_prefetch=0,
        grid=(Bp // tile_b,),
        in_specs=[
            pl.BlockSpec((tile_b, Dp), lambda i: (i, 0)),   # x tile
            full(w1p.shape), full(b1p.shape),
            full(w2p.shape), full(b2p.shape),
            full(w3p.shape), full(b3p.shape),
            full(w4p.shape), full(b4p.shape),
        ],
        out_specs=pl.BlockSpec((tile_b, Cp), lambda i: (i, 0)),
    )

    out_padded = pl.pallas_call(
        mlp_kernel,
        out_shape=jax.ShapeDtypeStruct((Bp, Cp), jnp.float32),
        grid_spec=grid_spec,
        compiler_params=pltpu.CompilerParams(
            dimension_semantics=("parallel",)),
    )(xp, w1p, b1p, w2p, b2p, w3p, b3p, w4p, b4p)

    return out_padded[:B, :C]


def init_params(key, input_size, hidden_size, num_classes):
    """Deterministic synthetic init; weights stored (in, out), biases (1, out)."""
    dims = [(input_size, hidden_size), (hidden_size, 256), (256, 64), (64, num_classes)]
    params = {}
    for idx, (fan_in, fan_out) in enumerate(dims, start=1):
        key, kw, kb = jax.random.split(key, 3)
        scale = 1.0 / jnp.sqrt(jnp.float32(fan_in))
        params[f"w{idx}"] = jax.random.uniform(
            kw, (fan_in, fan_out), jnp.float32, -scale, scale)
        params[f"b{idx}"] = jax.random.uniform(
            kb, (1, fan_out), jnp.float32, -scale, scale)
    return params


def mlp_reference(x, params):
    """Pure-JAX reference mirroring the kernel's mixed precision (bf16 operands, f32 acc)."""
    def mm(a, w):
        return jnp.dot(a.astype(jnp.bfloat16), w.astype(jnp.bfloat16),
                       preferred_element_type=jnp.float32)
    h = jnp.maximum(mm(x, params["w1"]) + params["b1"], 0.0)
    h = jnp.maximum(mm(h, params["w2"]) + params["b2"], 0.0)
    h = jnp.maximum(mm(h, params["w3"]) + params["b3"], 0.0)
    return mm(h, params["w4"]) + params["b4"]


if __name__ == "__main__":
    key = jax.random.PRNGKey(0)
    batch, input_size, hidden_size, num_classes = 16, 32, 32, 16

    key, kx, kp = jax.random.split(key, 3)
    x = jax.random.normal(kx, (batch, input_size), jnp.float32)
    params = init_params(kp, input_size, hidden_size, num_classes)

    out = mlp_forward(x, params)
    out = jax.block_until_ready(out)

    ref = mlp_reference(x, params)
    assert out.shape == (batch, num_classes)
    assert jnp.allclose(out, ref, atol=1e-2, rtol=1e-2), "mismatch vs reference"

    print("KERNEL_OK")
</pallas_src>

<mosaic_0001>
module attributes {stable_mosaic.version = 11 : i64} {
  func.func @mlp_kernel(%arg0: i32, %arg1: memref<16x128xbf16, #tpu.memory_space<vmem>>, %arg2: memref<128x128xbf16, #tpu.memory_space<vmem>>, %arg3: memref<1x128xf32, #tpu.memory_space<vmem>>, %arg4: memref<128x256xbf16, #tpu.memory_space<vmem>>, %arg5: memref<1x256xf32, #tpu.memory_space<vmem>>, %arg6: memref<256x128xbf16, #tpu.memory_space<vmem>>, %arg7: memref<1x128xf32, #tpu.memory_space<vmem>>, %arg8: memref<128x128xbf16, #tpu.memory_space<vmem>>, %arg9: memref<1x128xf32, #tpu.memory_space<vmem>>, %arg10: memref<16x128xf32, #tpu.memory_space<vmem>>) attributes {dimension_semantics = [#tpu.dimension_semantics<parallel>], iteration_bounds = array<i64: 1>, scalar_prefetch = 0 : i64, scratch_operands = 0 : i64, tpu.core_type = #tpu.core_type<tc>, window_params = [{transform_indices = @transform_0, window_bounds = array<i64: 16, 128>}, {pipeline_mode = #tpu.pipeline_mode<synchronous>, transform_indices = @transform_1, window_bounds = array<i64: 128, 128>}, {pipeline_mode = #tpu.pipeline_mode<synchronous>, transform_indices = @transform_2, window_bounds = array<i64: 1, 128>}, {pipeline_mode = #tpu.pipeline_mode<synchronous>, transform_indices = @transform_3, window_bounds = array<i64: 128, 256>}, {pipeline_mode = #tpu.pipeline_mode<synchronous>, transform_indices = @transform_4, window_bounds = array<i64: 1, 256>}, {pipeline_mode = #tpu.pipeline_mode<synchronous>, transform_indices = @transform_5, window_bounds = array<i64: 256, 128>}, {pipeline_mode = #tpu.pipeline_mode<synchronous>, transform_indices = @transform_6, window_bounds = array<i64: 1, 128>}, {pipeline_mode = #tpu.pipeline_mode<synchronous>, transform_indices = @transform_7, window_bounds = array<i64: 128, 128>}, {pipeline_mode = #tpu.pipeline_mode<synchronous>, transform_indices = @transform_8, window_bounds = array<i64: 1, 128>}, {transform_indices = @transform_9, window_bounds = array<i64: 16, 128>}]} {
    %c0 = arith.constant 0 : index
    %c0_0 = arith.constant 0 : index
    %0 = vector.load %arg1[%c0, %c0_0] : memref<16x128xbf16, #tpu.memory_space<vmem>>, vector<16x128xbf16>
    %c0_1 = arith.constant 0 : index
    %c0_2 = arith.constant 0 : index
    %1 = vector.load %arg2[%c0_1, %c0_2] : memref<128x128xbf16, #tpu.memory_space<vmem>>, vector<128x128xbf16>
    %cst = arith.constant dense<0.000000e+00> : vector<16x128xf32>
    %2 = tpu.matmul %0, %1, %cst {dimension_numbers = #tpu.dot_dimension_numbers<[1], [0], [0], [1], [0, 0, 1, 1], [], []>} : vector<16x128xbf16>, vector<128x128xbf16>, vector<16x128xf32> -> vector<16x128xf32>
    %c0_3 = arith.constant 0 : index
    %c0_4 = arith.constant 0 : index
    %3 = vector.load %arg3[%c0_3, %c0_4] : memref<1x128xf32, #tpu.memory_space<vmem>>, vector<1x128xf32>
    %4 = vector.broadcast %3 : vector<1x128xf32> to vector<16x128xf32>
    %5 = arith.addf %2, %4 : vector<16x128xf32>
    %cst_5 = arith.constant 0.000000e+00 : f32
    %6 = vector.broadcast %cst_5 : f32 to vector<16x128xf32>
    %7 = arith.maximumf %5, %6 : vector<16x128xf32>
    %8 = arith.truncf %7 : vector<16x128xf32> to vector<16x128xbf16>
    %c0_6 = arith.constant 0 : index
    %c0_7 = arith.constant 0 : index
    %9 = vector.load %arg4[%c0_6, %c0_7] : memref<128x256xbf16, #tpu.memory_space<vmem>>, vector<128x256xbf16>
    %cst_8 = arith.constant dense<0.000000e+00> : vector<16x256xf32>
    %10 = tpu.matmul %8, %9, %cst_8 {dimension_numbers = #tpu.dot_dimension_numbers<[1], [0], [0], [1], [0, 0, 1, 1], [], []>} : vector<16x128xbf16>, vector<128x256xbf16>, vector<16x256xf32> -> vector<16x256xf32>
    %c0_9 = arith.constant 0 : index
    %c0_10 = arith.constant 0 : index
    %11 = vector.load %arg5[%c0_9, %c0_10] : memref<1x256xf32, #tpu.memory_space<vmem>>, vector<1x256xf32>
    %12 = vector.broadcast %11 : vector<1x256xf32> to vector<16x256xf32>
    %13 = arith.addf %10, %12 : vector<16x256xf32>
    %cst_11 = arith.constant 0.000000e+00 : f32
    %14 = vector.broadcast %cst_11 : f32 to vector<16x256xf32>
    %15 = arith.maximumf %13, %14 : vector<16x256xf32>
    %16 = arith.truncf %15 : vector<16x256xf32> to vector<16x256xbf16>
    %c0_12 = arith.constant 0 : index
    %c0_13 = arith.constant 0 : index
    %17 = vector.load %arg6[%c0_12, %c0_13] : memref<256x128xbf16, #tpu.memory_space<vmem>>, vector<256x128xbf16>
    %cst_14 = arith.constant dense<0.000000e+00> : vector<16x128xf32>
    %18 = tpu.matmul %16, %17, %cst_14 {dimension_numbers = #tpu.dot_dimension_numbers<[1], [0], [0], [1], [0, 0, 1, 1], [], []>} : vector<16x256xbf16>, vector<256x128xbf16>, vector<16x128xf32> -> vector<16x128xf32>
    %c0_15 = arith.constant 0 : index
    %c0_16 = arith.constant 0 : index
    %19 = vector.load %arg7[%c0_15, %c0_16] : memref<1x128xf32, #tpu.memory_space<vmem>>, vector<1x128xf32>
    %20 = vector.broadcast %19 : vector<1x128xf32> to vector<16x128xf32>
    %21 = arith.addf %18, %20 : vector<16x128xf32>
    %cst_17 = arith.constant 0.000000e+00 : f32
    %22 = vector.broadcast %cst_17 : f32 to vector<16x128xf32>
    %23 = arith.maximumf %21, %22 : vector<16x128xf32>
    %24 = arith.truncf %23 : vector<16x128xf32> to vector<16x128xbf16>
    %c0_18 = arith.constant 0 : index
    %c0_19 = arith.constant 0 : index
    %25 = vector.load %arg8[%c0_18, %c0_19] : memref<128x128xbf16, #tpu.memory_space<vmem>>, vector<128x128xbf16>
    %cst_20 = arith.constant dense<0.000000e+00> : vector<16x128xf32>
    %26 = tpu.matmul %24, %25, %cst_20 {dimension_numbers = #tpu.dot_dimension_numbers<[1], [0], [0], [1], [0, 0, 1, 1], [], []>} : vector<16x128xbf16>, vector<128x128xbf16>, vector<16x128xf32> -> vector<16x128xf32>
    %c0_21 = arith.constant 0 : index
    %c0_22 = arith.constant 0 : index
    %27 = vector.load %arg9[%c0_21, %c0_22] : memref<1x128xf32, #tpu.memory_space<vmem>>, vector<1x128xf32>
    %28 = vector.broadcast %27 : vector<1x128xf32> to vector<16x128xf32>
    %29 = arith.addf %26, %28 : vector<16x128xf32>
    %c0_23 = arith.constant 0 : index
    %c0_24 = arith.constant 0 : index
    %30 = vector.load %arg10[%c0_23, %c0_24] : memref<16x128xf32, #tpu.memory_space<vmem>>, vector<16x128xf32>
    tpu.vector_store %arg10[%c0_23, %c0_24], %29 {strides = array<i32>} : memref<16x128xf32, #tpu.memory_space<vmem>>, vector<16x128xf32>,
    return
  }
  func.func @transform_0(%arg0: i32) -> (i32, i32) {
    %c0_i32 = arith.constant 0 : i32
    %c0_i32_0 = arith.constant 0 : i32
    return %arg0, %c0_i32 : i32, i32
  }
  func.func @transform_1(%arg0: i32) -> (i32, i32) {
    %c0_i32 = arith.constant 0 : i32
    %c0_i32_0 = arith.constant 0 : i32
    %c0_i32_1 = arith.constant 0 : i32
    return %c0_i32, %c0_i32_0 : i32, i32
  }
  func.func @transform_2(%arg0: i32) -> (i32, i32) {
    %c0_i32 = arith.constant 0 : i32
    %c0_i32_0 = arith.constant 0 : i32
    %c0_i32_1 = arith.constant 0 : i32
    return %c0_i32, %c0_i32_0 : i32, i32
  }
  func.func @transform_3(%arg0: i32) -> (i32, i32) {
    %c0_i32 = arith.constant 0 : i32
    %c0_i32_0 = arith.constant 0 : i32
    %c0_i32_1 = arith.constant 0 : i32
    return %c0_i32, %c0_i32_0 : i32, i32
  }
  func.func @transform_4(%arg0: i32) -> (i32, i32) {
    %c0_i32 = arith.constant 0 : i32
    %c0_i32_0 = arith.constant 0 : i32
    %c0_i32_1 = arith.constant 0 : i32
    return %c0_i32, %c0_i32_0 : i32, i32
  }
  func.func @transform_5(%arg0: i32) -> (i32, i32) {
    %c0_i32 = arith.constant 0 : i32
    %c0_i32_0 = arith.constant 0 : i32
    %c0_i32_1 = arith.constant 0 : i32
    return %c0_i32, %c0_i32_0 : i32, i32
  }
  func.func @transform_6(%arg0: i32) -> (i32, i32) {
    %c0_i32 = arith.constant 0 : i32
    %c0_i32_0 = arith.constant 0 : i32
    %c0_i32_1 = arith.constant 0 : i32
    return %c0_i32, %c0_i32_0 : i32, i32
  }
  func.func @transform_7(%arg0: i32) -> (i32, i32) {
    %c0_i32 = arith.constant 0 : i32
    %c0_i32_0 = arith.constant 0 : i32
    %c0_i32_1 = arith.constant 0 : i32
    return %c0_i32, %c0_i32_0 : i32, i32
  }
  func.func @transform_8(%arg0: i32) -> (i32, i32) {
    %c0_i32 = arith.constant 0 : i32
    %c0_i32_0 = arith.constant 0 : i32
    %c0_i32_1 = arith.constant 0 : i32
    return %c0_i32, %c0_i32_0 : i32, i32
  }
  func.func @transform_9(%arg0: i32) -> (i32, i32) {
    %c0_i32 = arith.constant 0 : i32
    %c0_i32_0 = arith.constant 0 : i32
    return %arg0, %c0_i32 : i32, i32
  }
}

</mosaic_0001>

<llo_original>
// kernel: tpu_custom_call.1
$region0: #{tpu_custom_call.1}
  #allocation0 [shape = 'u32[]', space=smem, size = 0x4, offset = 0x4, fixed_abs, tag = 'smem constant byte address 0x4 - core index']
  #allocation1 [shape = 'u32[72,128]{1,0:T(1,128)}', space=vmem, size = 0x9000, scoped, tag = 'internal scratch']
  %s0 = inlined_call_operand.hbm [shape: bf16[16,128], index: 0, kind: input, shape index: {}]
  %s1 = inlined_call_operand.hbm [shape: bf16[128,128], index: 1, kind: input, shape index: {}]
  %s2 = inlined_call_operand.vmem [shape: f32[1,128], index: 2, kind: input, shape index: {}]
  %s3 = inlined_call_operand.hbm [shape: bf16[128,256], index: 3, kind: input, shape index: {}]
  %s4 = inlined_call_operand.vmem [shape: f32[1,256], index: 4, kind: input, shape index: {}]
  %s5 = inlined_call_operand.hbm [shape: bf16[256,128], index: 5, kind: input, shape index: {}]
  %s6 = inlined_call_operand.vmem [shape: f32[1,128], index: 6, kind: input, shape index: {}]
  %s7 = inlined_call_operand.hbm [shape: bf16[128,128], index: 7, kind: input, shape index: {}]
  %s8 = inlined_call_operand.vmem [shape: f32[1,128], index: 8, kind: input, shape index: {}]
  %s9 = inlined_call_operand.hbm [shape: f32[16,128], index: 9, kind: output, shape index: {}]
  %s10 = sld [smem:[#allocation0]]
  $region66: #{tpu_custom_call.1} parent=0
    _
  %s12 = ssub.s32 1, %s10
  %s13 = scalar_select 0, %s12, %s10
  $region1: #{tpu_custom_call.1} parent=0
    #allocation2 [shape = 'u8[4096]{0}', space=vmem, size = 0x1000, scoped, tag = 'input window, operand 0, single buffered']
    #allocation3 [shape = 's32[1]{0}', space=sflag, size = 0x4, scoped, tag = 'scoped memory for tpu_custom_call.1']
    #allocation4 [shape = 's32[1]{0}', space=sflag, size = 0x4, scoped, tag = 'scoped memory for tpu_custom_call.1']
    #allocation5 [shape = 'u8[32768]{0}', space=vmem, size = 0x8000, scoped, tag = 'input window, operand 1, single buffered']
    #allocation6 [shape = 's32[1]{0}', space=sflag, size = 0x4, scoped, tag = 'scoped memory for tpu_custom_call.1']
    #allocation7 [shape = 'u8[65536]{0}', space=vmem, size = 0x10000, scoped, tag = 'input window, operand 3, single buffered']
    #allocation8 [shape = 'u8[65536]{0}', space=vmem, size = 0x10000, scoped, tag = 'input window, operand 5, single buffered']
    #allocation9 [shape = 's32[1]{0}', space=sflag, size = 0x4, scoped, tag = 'scoped memory for tpu_custom_call.1']
    #allocation10 [shape = 'u8[32768]{0}', space=vmem, size = 0x8000, scoped, tag = 'input window, operand 7, single buffered']
    #allocation11 [shape = 'u8[8192]{0}', space=vmem, size = 0x2000, scoped, tag = 'output window, operand 0, single buffered']
    %14 = vsyncpa [#allocation3], 0
    %15 = vsyncpa [#allocation6], 0
    %16 = vsyncpa [#allocation9], 0
    %17 = vsyncpa [#allocation4], 0
    // Predicated region
    $region2: #{tpu_custom_call.1} parent=1 // pred_check
      _
    $region3: #{tpu_custom_call.1} parent=1 // pred_check_branch
      %19 = sbr.rel (0) target = $region5
    $region4: #{tpu_custom_call.1} parent=1 // pred_region
      %21 = vsyncadd [#allocation3], 0
      %s22 = sshll.u32 %s0, 4
      %s23 = int_to_ptr.hbm [resolvable:$true] %s22
      %s24 = sshll.u32 [#allocation2], 4
      %s25 = int_to_ptr.vmem [resolvable:$true] %s24
      %30 = dma.hbm_to_vmem [thread:$0]  %s23, 128, %s25, [#allocation3], 64, 64, 4
    $region5: #{tpu_custom_call.1} parent=1 // pred_fallthru
      _
    // Predicated region
    $region6: #{tpu_custom_call.1} parent=1 // pred_check
      _
    $region7: #{tpu_custom_call.1} parent=1 // pred_check_branch
      %32 = sbr.rel (0) target = $region9
    $region8: #{tpu_custom_call.1} parent=1 // pred_region
      %34 = vsyncadd [#allocation6], 0
      %s35 = sshll.u32 %s1, 4
      %s36 = int_to_ptr.hbm [resolvable:$true] %s35
      %s37 = sshll.u32 [#allocation5], 4
      %s38 = int_to_ptr.vmem [resolvable:$true] %s37
      %43 = dma.hbm_to_vmem [thread:$0]  %s36, 1024, %s38, [#allocation6], 64, 64, 4
    $region9: #{tpu_custom_call.1} parent=1 // pred_fallthru
      _
    // Predicated region
    $region10: #{tpu_custom_call.1} parent=1 // pred_check
      _
    $region11: #{tpu_custom_call.1} parent=1 // pred_check_branch
      %45 = sbr.rel (0) target = $region13
    $region12: #{tpu_custom_call.1} parent=1 // pred_region
      _
    $region13: #{tpu_custom_call.1} parent=1 // pred_fallthru
      _
    // Predicated region
    $region14: #{tpu_custom_call.1} parent=1 // pred_check
      _
    $region15: #{tpu_custom_call.1} parent=1 // pred_check_branch
      %47 = sbr.rel (0) target = $region17
    $region16: #{tpu_custom_call.1} parent=1 // pred_region
      %49 = vsyncadd [#allocation6], 0
      %s50 = sshll.u32 %s3, 4
      %s51 = int_to_ptr.hbm [resolvable:$true] %s50
      %s52 = sshll.u32 [#allocation7], 4
      %s53 = int_to_ptr.vmem [resolvable:$true] %s52
      %58 = dma.hbm_to_vmem [thread:$0]  %s51, 2048, %s53, [#allocation6], 128, 128, 8
    $region17: #{tpu_custom_call.1} parent=1 // pred_fallthru
      _
    // Predicated region
    $region18: #{tpu_custom_call.1} parent=1 // pred_check
      _
    $region19: #{tpu_custom_call.1} parent=1 // pred_check_branch
      %60 = sbr.rel (0) target = $region21
    $region20: #{tpu_custom_call.1} parent=1 // pred_region
      _
    $region21: #{tpu_custom_call.1} parent=1 // pred_fallthru
      _
    // Predicated region
    $region22: #{tpu_custom_call.1} parent=1 // pred_check
      _
    $region23: #{tpu_custom_call.1} parent=1 // pred_check_branch
      %62 = sbr.rel (0) target = $region25
    $region24: #{tpu_custom_call.1} parent=1 // pred_region
      %64 = vsyncadd [#allocation9], 0
      %s65 = sshll.u32 %s5, 4
      %s66 = int_to_ptr.hbm [resolvable:$true] %s65
      %s67 = sshll.u32 [#allocation8], 4
      %s68 = int_to_ptr.vmem [resolvable:$true] %s67
      %73 = dma.hbm_to_vmem [thread:$0]  %s66, 2048, %s68, [#allocation9], 64, 64, 4
    $region25: #{tpu_custom_call.1} parent=1 // pred_fallthru
      _
    // Predicated region
    $region26: #{tpu_custom_call.1} parent=1 // pred_check
      _
    $region27: #{tpu_custom_call.1} parent=1 // pred_check_branch
      %75 = sbr.rel (0) target = $region29
    $region28: #{tpu_custom_call.1} parent=1 // pred_region
      _
    $region29: #{tpu_custom_call.1} parent=1 // pred_fallthru
      _
    // Predicated region
    $region30: #{tpu_custom_call.1} parent=1 // pred_check
      _
    $region31: #{tpu_custom_call.1} parent=1 // pred_check_branch
      %77 = sbr.rel (0) target = $region33
    $region32: #{tpu_custom_call.1} parent=1 // pred_region
      %79 = vsyncadd [#allocation9], 0
      %s80 = sshll.u32 %s7, 4
      %s81 = int_to_ptr.hbm [resolvable:$true] %s80
      %s82 = sshll.u32 [#allocation10], 4
      %s83 = int_to_ptr.vmem [resolvable:$true] %s82
      %88 = dma.hbm_to_vmem [thread:$0]  %s81, 1024, %s83, [#allocation9], 64, 64, 4
    $region33: #{tpu_custom_call.1} parent=1 // pred_fallthru
      _
    // Predicated region
    $region34: #{tpu_custom_call.1} parent=1 // pred_check
      _
    $region35: #{tpu_custom_call.1} parent=1 // pred_check_branch
      %90 = sbr.rel (0) target = $region37
    $region36: #{tpu_custom_call.1} parent=1 // pred_region
      _
    $region37: #{tpu_custom_call.1} parent=1 // pred_fallthru
      _
    // Predicated region
    $region38: #{tpu_custom_call.1} parent=1 // pred_check
      _
    $region39: #{tpu_custom_call.1} parent=1 // pred_check_branch
      %92 = sbr.rel (0) target = $region41
    $region40: #{tpu_custom_call.1} parent=1 // pred_region
      %94 = dma.done [#allocation3], 128
    $region41: #{tpu_custom_call.1} parent=1 // pred_fallthru
      _
    // Predicated region
    $region42: #{tpu_custom_call.1} parent=1 // pred_check
      _
    $region43: #{tpu_custom_call.1} parent=1 // pred_check_branch
      %96 = sbr.rel (0) target = $region45
    $region44: #{tpu_custom_call.1} parent=1 // pred_region
      %98 = dma.done [#allocation6], 1024
    $region45: #{tpu_custom_call.1} parent=1 // pred_fallthru
      _
    // Predicated region
    $region46: #{tpu_custom_call.1} parent=1 // pred_check
      _
    $region47: #{tpu_custom_call.1} parent=1 // pred_check_branch
      %100 = sbr.rel (0) target = $region49
    $region48: #{tpu_custom_call.1} parent=1 // pred_region
      %102 = dma.done [#allocation6], 2048
    $region49: #{tpu_custom_call.1} parent=1 // pred_fallthru
      _
    // Predicated region
    $region50: #{tpu_custom_call.1} parent=1 // pred_check
      _
    $region51: #{tpu_custom_call.1} parent=1 // pred_check_branch
      %104 = sbr.rel (0) target = $region53
    $region52: #{tpu_custom_call.1} parent=1 // pred_region
      %106 = dma.done [#allocation9], 2048
    $region53: #{tpu_custom_call.1} parent=1 // pred_fallthru
      _
    // Predicated region
    $region54: #{tpu_custom_call.1} parent=1 // pred_check
      _
    $region55: #{tpu_custom_call.1} parent=1 // pred_check_branch
      %108 = sbr.rel (0) target = $region57
    $region56: #{tpu_custom_call.1} parent=1 // pred_region
      %110 = dma.done [#allocation9], 1024
    $region57: #{tpu_custom_call.1} parent=1 // pred_fallthru
      _
    %v111 = vld [vmem:[#allocation2] sm:$0xf]
    %v112 = vld [vmem:[#allocation2 + $0x4] sm:$0xf]
    %v113 = vld [vmem:[#allocation5] sm:$0xf]
    %v114 = vld [vmem:[#allocation5 + $0x4] sm:$0xf]
    %v115 = vld [vmem:[#allocation5 + $0x8] sm:$0xf]
    %v116 = vld [vmem:[#allocation5 + $0xc] sm:$0xf]
    %v117 = vld [vmem:[#allocation5 + $0x10] sm:$0xf]
    %v118 = vld [vmem:[#allocation5 + $0x14] sm:$0xf]
    %v119 = vld [vmem:[#allocation5 + $0x18] sm:$0xf]
    %v120 = vld [vmem:[#allocation5 + $0x1c] sm:$0xf]
    %v121 = vld [vmem:[#allocation5 + $0x20] sm:$0xf]
    %v122 = vld [vmem:[#allocation5 + $0x24] sm:$0xf]
    %v123 = vld [vmem:[#allocation5 + $0x28] sm:$0xf]
    %v124 = vld [vmem:[#allocation5 + $0x2c] sm:$0xf]
    %v125 = vld [vmem:[#allocation5 + $0x30] sm:$0xf]
    %v126 = vld [vmem:[#allocation5 + $0x34] sm:$0xf]
    %v127 = vld [vmem:[#allocation5 + $0x38] sm:$0xf]
    %v128 = vld [vmem:[#allocation5 + $0x3c] sm:$0xf]
    %v129 = vld [vmem:[%s2] sm:$0x1]
    %v131 = vperm.slane %v129, 0
    %v135 = vunpack.c.l.b16 %v111
    %v136 = vunpack.c.l.b16 %v112
    %v137 = vpack.c.b16 %v136, %v135
    %v155 = vunpack.c.l.b16 %v113
    %v156 = vunpack.c.l.b16 %v114
    %v157 = vunpack.c.l.b16 %v115
    %v158 = vunpack.c.l.b16 %v116
    %v159 = vunpack.c.l.b16 %v117
    %v160 = vunpack.c.l.b16 %v118
    %v161 = vunpack.c.l.b16 %v119
    %v162 = vunpack.c.l.b16 %v120
    %v163 = vunpack.c.l.b16 %v121
    %v164 = vunpack.c.l.b16 %v122
    %v165 = vunpack.c.l.b16 %v123
    %v166 = vunpack.c.l.b16 %v124
    %v167 = vunpack.c.l.b16 %v125
    %v168 = vunpack.c.l.b16 %v126
    %v169 = vunpack.c.l.b16 %v127
    %v170 = vunpack.c.l.b16 %v128
    %v171 = vpack.c.b16 %v156, %v155
    %v172 = vpack.c.b16 %v158, %v157
    %v173 = vpack.c.b16 %v160, %v159
    %v174 = vpack.c.b16 %v162, %v161
    %v175 = vpack.c.b16 %v164, %v163
    %v176 = vpack.c.b16 %v166, %v165
    %v177 = vpack.c.b16 %v168, %v167
    %v178 = vpack.c.b16 %v170, %v169
    %187 = vmatpush.bf16.msra.mxu0 %v178
    %188 = vmatpush.bf16.msra.mxu0 %v177
    %189 = vmatpush.bf16.msra.mxu0 %v176
    %190 = vmatpush.bf16.msra.mxu0 %v175
    %191 = vmatpush.bf16.msra.mxu0 %v174
    %192 = vmatpush.bf16.msra.mxu0 %v173
    %193 = vmatpush.bf16.msra.mxu0 %v172
    %194 = vmatpush.bf16.msra.mxu0 %v171
    %195 = vmatmul.bf16.gmra.mxu0 %v137
    %v196 = vpop.f32.mrf.mxu0
    %v197 = vadd.f32 %v131, %v196
    %v198 = vpop.f32.mrf.mxu0
    %v199 = vadd.f32 %v131, %v198
    %200 = vdwg.mxu0
    %v201 = vmax.f32 %v197, 0.0
    %v202 = vmax.f32 %v199, 0.0
    %v203 = vpack.c.bf16 %v202, %v201
    %v204 = vld [vmem:[#allocation7] sm:$0xff]
    %v205 = vld [vmem:[#allocation7 + $0x8] sm:$0xff]
    %v206 = vld [vmem:[#allocation7 + $0x10] sm:$0xff]
    %v207 = vld [vmem:[#allocation7 + $0x18] sm:$0xff]
    %v208 = vld [vmem:[#allocation7 + $0x20] sm:$0xff]
    %v209 = vld [vmem:[#allocation7 + $0x28] sm:$0xff]
    %v210 = vld [vmem:[#allocation7 + $0x30] sm:$0xff]
    %v211 = vld [vmem:[#allocation7 + $0x38] sm:$0xff]
    %v212 = vld [vmem:[#allocation7 + $0x40] sm:$0xff]
    %v213 = vld [vmem:[#allocation7 + $0x48] sm:$0xff]
    %v214 = vld [vmem:[#allocation7 + $0x50] sm:$0xff]
    %v215 = vld [vmem:[#allocation7 + $0x58] sm:$0xff]
    %v216 = vld [vmem:[#allocation7 + $0x60] sm:$0xff]
    %v217 = vld [vmem:[#allocation7 + $0x68] sm:$0xff]
    %v218 = vld [vmem:[#allocation7 + $0x70] sm:$0xff]
    %v219 = vld [vmem:[#allocation7 + $0x78] sm:$0xff]
    %v220 = vld [vmem:[%s4] sm:$0x3]
    %v222 = vperm.slane %v220, 0
    %v223 = vperm.slane %v220, 1
    %v242 = vunpack.c.l.b16 %v204
    %v243 = vunpack.c.h.b16 %v204
    %v244 = vunpack.c.l.b16 %v205
    %v245 = vunpack.c.h.b16 %v205
    %v246 = vunpack.c.l.b16 %v206
    %v247 = vunpack.c.h.b16 %v206
    %v248 = vunpack.c.l.b16 %v207
    %v249 = vunpack.c.h.b16 %v207
    %v250 = vunpack.c.l.b16 %v208
    %v251 = vunpack.c.h.b16 %v208
    %v252 = vunpack.c.l.b16 %v209
    %v253 = vunpack.c.h.b16 %v209
    %v254 = vunpack.c.l.b16 %v210
    %v255 = vunpack.c.h.b16 %v210
    %v256 = vunpack.c.l.b16 %v211
    %v257 = vunpack.c.h.b16 %v211
    %v258 = vunpack.c.l.b16 %v212
    %v259 = vunpack.c.h.b16 %v212
    %v260 = vunpack.c.l.b16 %v213
    %v261 = vunpack.c.h.b16 %v213
    %v262 = vunpack.c.l.b16 %v214
    %v263 = vunpack.c.h.b16 %v214
    %v264 = vunpack.c.l.b16 %v215
    %v265 = vunpack.c.h.b16 %v215
    %v266 = vunpack.c.l.b16 %v216
    %v267 = vunpack.c.h.b16 %v216
    %v268 = vunpack.c.l.b16 %v217
    %v269 = vunpack.c.h.b16 %v217
    %v270 = vunpack.c.l.b16 %v218
    %v271 = vunpack.c.h.b16 %v218
    %v272 = vunpack.c.l.b16 %v219
    %v273 = vunpack.c.h.b16 %v219
    %v274 = vpack.c.b16 %v244, %v242
    %v275 = vpack.c.b16 %v245, %v243
    %v276 = vpack.c.b16 %v248, %v246
    %v277 = vpack.c.b16 %v249, %v247
    %v278 = vpack.c.b16 %v252, %v250
    %v279 = vpack.c.b16 %v253, %v251
    %v280 = vpack.c.b16 %v256, %v254
    %v281 = vpack.c.b16 %v257, %v255
    %v282 = vpack.c.b16 %v260, %v258
    %v283 = vpack.c.b16 %v261, %v259
    %v284 = vpack.c.b16 %v264, %v262
    %v285 = vpack.c.b16 %v265, %v263
    %v286 = vpack.c.b16 %v268, %v266
    %v287 = vpack.c.b16 %v269, %v267
    %v288 = vpack.c.b16 %v272, %v270
    %v289 = vpack.c.b16 %v273, %v271
    %306 = vmatpush.bf16.msra.mxu0 %v288
    %307 = vmatpush.bf16.msra.mxu0 %v286
    %308 = vmatpush.bf16.msra.mxu0 %v284
    %309 = vmatpush.bf16.msra.mxu0 %v282
    %310 = vmatpush.bf16.msra.mxu0 %v280
    %311 = vmatpush.bf16.msra.mxu0 %v278
    %312 = vmatpush.bf16.msra.mxu0 %v276
    %313 = vmatpush.bf16.msra.mxu0 %v274
    %314 = vmatmul.bf16.gmra.mxu0 %v203
    %v315 = vpop.f32.mrf.mxu0
    %v316 = vadd.f32 %v222, %v315
    %v317 = vpop.f32.mrf.mxu0
    %v318 = vadd.f32 %v222, %v317
    %319 = vdwg.mxu0
    %320 = vmatpush.bf16.msra.mxu0 %v289
    %321 = vmatpush.bf16.msra.mxu0 %v287
    %322 = vmatpush.bf16.msra.mxu0 %v285
    %323 = vmatpush.bf16.msra.mxu0 %v283
    %324 = vmatpush.bf16.msra.mxu0 %v281
    %325 = vmatpush.bf16.msra.mxu0 %v279
    %326 = vmatpush.bf16.msra.mxu0 %v277
    %327 = vmatpush.bf16.msra.mxu0 %v275
    %328 = vmatmul.bf16.gmra.mxu0 %v203
    %v329 = vpop.f32.mrf.mxu0
    %v330 = vadd.f32 %v223, %v329
    %v331 = vpop.f32.mrf.mxu0
    %v332 = vadd.f32 %v223, %v331
    %333 = vdwg.mxu0
    %v334 = vmax.f32 %v316, 0.0
    %v335 = vmax.f32 %v330, 0.0
    %v336 = vmax.f32 %v318, 0.0
    %v337 = vmax.f32 %v332, 0.0
    %v338 = vpack.c.bf16 %v336, %v334
    %v339 = vpack.c.bf16 %v337, %v335
    %v340 = vld [vmem:[#allocation8] sm:$0xf]
    %v341 = vld [vmem:[#allocation8 + $0x4] sm:$0xf]
    %v342 = vld [vmem:[#allocation8 + $0x8] sm:$0xf]
    %v343 = vld [vmem:[#allocation8 + $0xc] sm:$0xf]
    %v344 = vld [vmem:[#allocation8 + $0x10] sm:$0xf]
    %v345 = vld [vmem:[#allocation8 + $0x14] sm:$0xf]
    %v346 = vld [vmem:[#allocation8 + $0x18] sm:$0xf]
    %v347 = vld [vmem:[#allocation8 + $0x1c] sm:$0xf]
    %v348 = vld [vmem:[#allocation8 + $0x20] sm:$0xf]
    %v349 = vld [vmem:[#allocation8 + $0x24] sm:$0xf]
    %v350 = vld [vmem:[#allocation8 + $0x28] sm:$0xf]
    %v351 = vld [vmem:[#allocation8 + $0x2c] sm:$0xf]
    %v352 = vld [vmem:[#allocation8 + $0x30] sm:$0xf]
    %v353 = vld [vmem:[#allocation8 + $0x34] sm:$0xf]
    %v354 = vld [vmem:[#allocation8 + $0x38] sm:$0xf]
    %v355 = vld [vmem:[#allocation8 + $0x3c] sm:$0xf]
    %v356 = vld [vmem:[#allocation8 + $0x40] sm:$0xf]
    %v357 = vld [vmem:[#allocation8 + $0x44] sm:$0xf]
    %v358 = vld [vmem:[#allocation8 + $0x48] sm:$0xf]
    %v359 = vld [vmem:[#allocation8 + $0x4c] sm:$0xf]
    %v360 = vld [vmem:[#allocation8 + $0x50] sm:$0xf]
    %v361 = vld [vmem:[#allocation8 + $0x54] sm:$0xf]
    %v362 = vld [vmem:[#allocation8 + $0x58] sm:$0xf]
    %v363 = vld [vmem:[#allocation8 + $0x5c] sm:$0xf]
    %v364 = vld [vmem:[#allocation8 + $0x60] sm:$0xf]
    %v365 = vld [vmem:[#allocation8 + $0x64] sm:$0xf]
    %v366 = vld [vmem:[#allocation8 + $0x68] sm:$0xf]
    %v367 = vld [vmem:[#allocation8 + $0x6c] sm:$0xf]
    %v368 = vld [vmem:[#allocation8 + $0x70] sm:$0xf]
    %v369 = vld [vmem:[#allocation8 + $0x74] sm:$0xf]
    %v370 = vld [vmem:[#allocation8 + $0x78] sm:$0xf]
    %v371 = vld [vmem:[#allocation8 + $0x7c] sm:$0xf]
    %v372 = vld [vmem:[%s6] sm:$0x1]
    %v374 = vperm.slane %v372, 0
    %v408 = vunpack.c.l.b16 %v340
    %v409 = vunpack.c.l.b16 %v341
    %v410 = vunpack.c.l.b16 %v342
    %v411 = vunpack.c.l.b16 %v343
    %v412 = vunpack.c.l.b16 %v344
    %v413 = vunpack.c.l.b16 %v345
    %v414 = vunpack.c.l.b16 %v346
    %v415 = vunpack.c.l.b16 %v347
    %v416 = vunpack.c.l.b16 %v348
    %v417 = vunpack.c.l.b16 %v349
    %v418 = vunpack.c.l.b16 %v350
    %v419 = vunpack.c.l.b16 %v351
    %v420 = vunpack.c.l.b16 %v352
    %v421 = vunpack.c.l.b16 %v353
    %v422 = vunpack.c.l.b16 %v354
    %v423 = vunpack.c.l.b16 %v355
    %v424 = vunpack.c.l.b16 %v356
    %v425 = vunpack.c.l.b16 %v357
    %v426 = vunpack.c.l.b16 %v358
    %v427 = vunpack.c.l.b16 %v359
    %v428 = vunpack.c.l.b16 %v360
    %v429 = vunpack.c.l.b16 %v361
    %v430 = vunpack.c.l.b16 %v362
    %v431 = vunpack.c.l.b16 %v363
    %v432 = vunpack.c.l.b16 %v364
    %v433 = vunpack.c.l.b16 %v365
    %v434 = vunpack.c.l.b16 %v366
    %v435 = vunpack.c.l.b16 %v367
    %v436 = vunpack.c.l.b16 %v368
    %v437 = vunpack.c.l.b16 %v369
    %v438 = vunpack.c.l.b16 %v370
    %v439 = vunpack.c.l.b16 %v371
    %v440 = vpack.c.b16 %v409, %v408
    %v441 = vpack.c.b16 %v411, %v410
    %v442 = vpack.c.b16 %v413, %v412
    %v443 = vpack.c.b16 %v415, %v414
    %v444 = vpack.c.b16 %v417, %v416
    %v445 = vpack.c.b16 %v419, %v418
    %v446 = vpack.c.b16 %v421, %v420
    %v447 = vpack.c.b16 %v423, %v422
    %v448 = vpack.c.b16 %v425, %v424
    %v449 = vpack.c.b16 %v427, %v426
    %v450 = vpack.c.b16 %v429, %v428
    %v451 = vpack.c.b16 %v431, %v430
    %v452 = vpack.c.b16 %v433, %v432
    %v453 = vpack.c.b16 %v435, %v434
    %v454 = vpack.c.b16 %v437, %v436
    %v455 = vpack.c.b16 %v439, %v438
    %472 = vmatpush.bf16.msra.mxu0 %v447
    %473 = vmatpush.bf16.msra.mxu0 %v446
    %474 = vmatpush.bf16.msra.mxu0 %v445
    %475 = vmatpush.bf16.msra.mxu0 %v444
    %476 = vmatpush.bf16.msra.mxu0 %v443
    %477 = vmatpush.bf16.msra.mxu0 %v442
    %478 = vmatpush.bf16.msra.mxu0 %v441
    %479 = vmatpush.bf16.msra.mxu0 %v440
    %480 = vmatmul.bf16.gmra.mxu0 %v338
    %v481 = vpop.f32.mrf.mxu0
    %v482 = vadd.f32 %v374, %v481
    %v483 = vpop.f32.mrf.mxu0
    %v484 = vadd.f32 %v374, %v483
    %485 = vdwg.mxu0
    %486 = vmatpush.bf16.msra.mxu0 %v455
    %487 = vmatpush.bf16.msra.mxu0 %v454
    %488 = vmatpush.bf16.msra.mxu0 %v453
    %489 = vmatpush.bf16.msra.mxu0 %v452
    %490 = vmatpush.bf16.msra.mxu0 %v451
    %491 = vmatpush.bf16.msra.mxu0 %v450
    %492 = vmatpush.bf16.msra.mxu0 %v449
    %493 = vmatpush.bf16.msra.mxu0 %v448
    %494 = vmatmul.bf16.gmra.mxu0 %v339
    %v495 = vpop.f32.mrf.mxu0
    %v496 = vadd.f32 %v482, %v495
    %v497 = vpop.f32.mrf.mxu0
    %v498 = vadd.f32 %v484, %v497
    %499 = vdwg.mxu0
    %v500 = vmax.f32 %v496, 0.0
    %v501 = vmax.f32 %v498, 0.0
    %v502 = vpack.c.bf16 %v501, %v500
    %v503 = vld [vmem:[#allocation10] sm:$0xf]
    %v504 = vld [vmem:[#allocation10 + $0x4] sm:$0xf]
    %v505 = vld [vmem:[#allocation10 + $0x8] sm:$0xf]
    %v506 = vld [vmem:[#allocation10 + $0xc] sm:$0xf]
    %v507 = vld [vmem:[#allocation10 + $0x10] sm:$0xf]
    %v508 = vld [vmem:[#allocation10 + $0x14] sm:$0xf]
    %v509 = vld [vmem:[#allocation10 + $0x18] sm:$0xf]
    %v510 = vld [vmem:[#allocation10 + $0x1c] sm:$0xf]
    %v511 = vld [vmem:[#allocation10 + $0x20] sm:$0xf]
    %v512 = vld [vmem:[#allocation10 + $0x24] sm:$0xf]
    %v513 = vld [vmem:[#allocation10 + $0x28] sm:$0xf]
    %v514 = vld [vmem:[#allocation10 + $0x2c] sm:$0xf]
    %v515 = vld [vmem:[#allocation10 + $0x30] sm:$0xf]
    %v516 = vld [vmem:[#allocation10 + $0x34] sm:$0xf]
    %v517 = vld [vmem:[#allocation10 + $0x38] sm:$0xf]
    %v518 = vld [vmem:[#allocation10 + $0x3c] sm:$0xf]
    %v519 = vld [vmem:[%s8] sm:$0x1]
    %v521 = vperm.slane %v519, 0
    %v539 = vunpack.c.l.b16 %v503
    %v540 = vunpack.c.l.b16 %v504
    %v541 = vunpack.c.l.b16 %v505
    %v542 = vunpack.c.l.b16 %v506
    %v543 = vunpack.c.l.b16 %v507
    %v544 = vunpack.c.l.b16 %v508
    %v545 = vunpack.c.l.b16 %v509
    %v546 = vunpack.c.l.b16 %v510
    %v547 = vunpack.c.l.b16 %v511
    %v548 = vunpack.c.l.b16 %v512
    %v549 = vunpack.c.l.b16 %v513
    %v550 = vunpack.c.l.b16 %v514
    %v551 = vunpack.c.l.b16 %v515
    %v552 = vunpack.c.l.b16 %v516
    %v553 = vunpack.c.l.b16 %v517
    %v554 = vunpack.c.l.b16 %v518
    %v555 = vpack.c.b16 %v540, %v539
    %v556 = vpack.c.b16 %v542, %v541
    %v557 = vpack.c.b16 %v544, %v543
    %v558 = vpack.c.b16 %v546, %v545
    %v559 = vpack.c.b16 %v548, %v547
    %v560 = vpack.c.b16 %v550, %v549
    %v561 = vpack.c.b16 %v552, %v551
    %v562 = vpack.c.b16 %v554, %v553
    %571 = vmatpush.bf16.msra.mxu0 %v562
    %572 = vmatpush.bf16.msra.mxu0 %v561
    %573 = vmatpush.bf16.msra.mxu0 %v560
    %574 = vmatpush.bf16.msra.mxu0 %v559
    %575 = vmatpush.bf16.msra.mxu0 %v558
    %576 = vmatpush.bf16.msra.mxu0 %v557
    %577 = vmatpush.bf16.msra.mxu0 %v556
    %578 = vmatpush.bf16.msra.mxu0 %v555
    %579 = vmatmul.bf16.gmra.mxu0 %v502
    %v580 = vpop.f32.mrf.mxu0
    %v581 = vadd.f32 %v521, %v580
    %v582 = vpop.f32.mrf.mxu0
    %v583 = vadd.f32 %v521, %v582
    %584 = vdwg.mxu0
    %585 = vst [vmem:[#allocation11] sm:$0xff] %v581
    %586 = vst [vmem:[#allocation11 + $0x8] sm:$0xff] %v583
    // Predicated region
    $region58: #{tpu_custom_call.1} parent=1 // pred_check
      _
    $region59: #{tpu_custom_call.1} parent=1 // pred_check_branch
      %588 = sbr.rel (0) target = $region61
    $region60: #{tpu_custom_call.1} parent=1 // pred_region
      %590 = vsyncadd [#allocation4], 0
      %s591 = sshll.u32 [#allocation11], 4
      %s592 = int_to_ptr.vmem [resolvable:$true] %s591
      %s593 = sshll.u32 %s9, 4
      %s594 = int_to_ptr.hbm [resolvable:$true] %s593
      %599 = dma.vmem_to_hbm [thread:$0]  %s592, 256, %s594, [#allocation4], 128, 128, 8
    $region61: #{tpu_custom_call.1} parent=1 // pred_fallthru
      _
    // Predicated region
    $region62: #{tpu_custom_call.1} parent=1 // pred_check
      _
    $region63: #{tpu_custom_call.1} parent=1 // pred_check_branch
      %601 = sbr.rel (0) target = $region65
    $region64: #{tpu_custom_call.1} parent=1 // pred_region
      %603 = dma.done [#allocation4], 256
    $region65: #{tpu_custom_call.1} parent=1 // pred_fallthru
      _
    %604 = vsyncpa [#allocation3], 1
    %605 = vsyncpa [#allocation6], 1
    %606 = vsyncpa [#allocation9], 1
    %607 = vsyncpa [#allocation4], 1

</llo_original>
